<compile_context>
chip_gen: v7x
topology: tpu7x:2x2x1
jax: 0.10.0
libtpu: 0.0.40
codegen_flags: <defaults>
</compile_context>

<pallas_src>
import functools

import jax
import jax.numpy as jnp
from jax.experimental import pallas as pl
from jax.experimental.pallas import tpu as pltpu


def _round_up(x, m):
    return ((x + m - 1) // m) * m


def _cdiv(a, b):
    return (a + b - 1) // b


def dnn_kernel(x_ref, w1_ref, b1_ref, w2_ref, b2_ref, o_ref):
    # In-kernel f32 -> bf16 cast of the activation tile (no wrapper HBM pass).
    x_bf = x_ref[...].astype(jnp.bfloat16)
    # fc1: (TB, D) bf16 @ (D, H) bf16 -> f32 accumulation on the MXU.
    h = jnp.dot(x_bf, w1_ref[...], preferred_element_type=jnp.float32)
    # Bias + ReLU epilogue in f32 (kept minimal for v5e's narrow VPU/store slots).
    h = jnp.maximum(h + b1_ref[...], 0.0)
    # fc2: bf16 LHS for MXU throughput, f32 accumulation.
    out = jnp.dot(h.astype(jnp.bfloat16), w2_ref[...],
                  preferred_element_type=jnp.float32)
    # bf16 output tile (lane-dense C_pad) -> halves the writeback stream.
    o_ref[...] = (out + b2_ref[...]).astype(o_ref.dtype)


def _resident_spec(shape, single_buffer):
    """BlockSpec for a VMEM-resident operand (constant index_map)."""
    idx = lambda i: (0, 0)
    buffered = getattr(pl, "Buffered", None)
    if single_buffer and buffered is not None:
        try:
            return pl.BlockSpec(shape, idx, pipeline_mode=buffered(1))
        except TypeError:
            pass  # older BlockSpec signature: fall back to default buffering
    return pl.BlockSpec(shape, idx)


@functools.partial(
    jax.jit,
    static_argnames=("class_num", "block_b", "single_buffer_residents"))
def dnn_forward(x, w1_bf, b1_f, w2_bf, b2_f, *, class_num, block_b=512,
                single_buffer_residents=True):
    B, D = x.shape
    H = w1_bf.shape[1]
    C_pad = w2_bf.shape[1]

    # ---- batch tile: multiple of 16, and >= 2 grid steps when possible so both
    # v7x TensorCores are used (harmless on single-TC v5e/v6e). -------------
    if B <= 16:
        TB = B                                   # full-dim block is always legal
    else:
        TB = min(int(block_b), _round_up(_cdiv(B, 2), 16))
        TB = max(16, _round_up(TB, 16))
    grid = (pl.cdiv(B, TB),)                     # ragged last block handled by Pallas

    # ---- per-generation VMEM budget with headroom ----
    try:
        vmem_cap = int(pltpu.get_tpu_info().vmem_capacity_bytes)
    except Exception:
        vmem_cap = 64 << 20                      # conservative (v7x-sized) fallback
    vmem_cap = (vmem_cap * 7) // 8               # ~56 MiB on v7x, ~112 MiB on v5e/v6e

    weight_bufs = 1 if single_buffer_residents else 2
    weight_bytes = weight_bufs * (D * H * 2 + H * C_pad * 2 + (H + C_pad) * 4)
    stream_bytes = 2 * TB * (D * 4 + C_pad * 2)  # double-buffered f32 x + bf16 out tiles
    live_bytes = TB * (D * 2 + H * 6 + C_pad * 4)  # in-kernel bf16 x, f32/bf16 h, f32 logits
    vmem_bytes = int(min(vmem_cap,
                         max(32 << 20,
                             weight_bytes + stream_bytes + live_bytes + (4 << 20))))
    # TODO(synk): if bf16 weights ever outgrow vmem_cap (very large input_dim),
    # add a K grid axis with a pl.when-initialized f32 accumulator instead of
    # whole-weight residency (and consider fp8 fc1 weights on v7x).

    out = pl.pallas_call(
        dnn_kernel,
        out_shape=jax.ShapeDtypeStruct((B, C_pad), jnp.bfloat16),
        grid_spec=pltpu.PrefetchScalarGridSpec(
            num_scalar_prefetch=0,
            grid=grid,
            in_specs=[
                pl.BlockSpec((TB, D), lambda i: (i, 0)),         # x: streamed over batch
                _resident_spec((D, H), single_buffer_residents),  # w1
                _resident_spec((1, H), single_buffer_residents),  # b1
                _resident_spec((H, C_pad), single_buffer_residents),  # w2
                _resident_spec((1, C_pad), single_buffer_residents),  # b2
            ],
            out_specs=pl.BlockSpec((TB, C_pad), lambda i: (i, 0)),
        ),
        compiler_params=pltpu.CompilerParams(
            dimension_semantics=("parallel",),
            vmem_limit_bytes=vmem_bytes,
        ),
    )(x, w1_bf, b1_f, w2_bf, b2_f)

    return out[:, :class_num]


def prepare_params(w1, b1, w2, b2):
    """One-time param prep (call OUTSIDE the per-step forward): pad the class
    dim to a lane-dense multiple of 128 and cast weights to bf16 (biases f32)."""
    C = w2.shape[1]
    C_pad = _round_up(max(C, 128), 128)
    if C_pad != C:
        w2 = jnp.pad(w2, ((0, 0), (0, C_pad - C)))
        b2 = jnp.pad(b2, ((0, 0), (0, C_pad - C)))
    return (w1.astype(jnp.bfloat16), b1.astype(jnp.float32),
            w2.astype(jnp.bfloat16), b2.astype(jnp.float32))


def init_params(key, input_dim, hidden_dim, class_num):
    # Deterministic init mimicking nn.Linear's uniform(-1/sqrt(fan_in), 1/sqrt(fan_in)).
    k1, k2, k3, k4 = jax.random.split(key, 4)
    bound1 = 1.0 / jnp.sqrt(jnp.float32(input_dim))
    bound2 = 1.0 / jnp.sqrt(jnp.float32(hidden_dim))
    w1 = jax.random.uniform(k1, (input_dim, hidden_dim), jnp.float32, -bound1, bound1)
    b1 = jax.random.uniform(k2, (1, hidden_dim), jnp.float32, -bound1, bound1)
    w2 = jax.random.uniform(k3, (hidden_dim, class_num), jnp.float32, -bound2, bound2)
    b2 = jax.random.uniform(k4, (1, class_num), jnp.float32, -bound2, bound2)
    return w1, b1, w2, b2


if __name__ == "__main__":
    # Small shapes consistent with DNN(input_dim, class_num): x is (batch, input_dim).
    # batch=64 with the >=2-grid-step rule gives TB=32 -> a 2-step pipelined grid.
    batch, input_dim, hidden_dim, class_num = 64, 256, 128, 3

    key = jax.random.PRNGKey(0)
    kx, kp = jax.random.split(key)
    x = jax.random.normal(kx, (batch, input_dim), jnp.float32)
    w1, b1, w2, b2 = init_params(kp, input_dim, hidden_dim, class_num)
    params = prepare_params(w1, b1, w2, b2)   # one-time bf16 cast + class-dim pad

    try:
        out = dnn_forward(x, *params, class_num=class_num)
    except Exception:
        # Fallback if this JAX/Mosaic build rejects single-buffered residents.
        out = dnn_forward(x, *params, class_num=class_num,
                          single_buffer_residents=False)
    out = jax.block_until_ready(out)
    assert out.shape == (batch, class_num)

    # Reference in plain JAX with the same bf16 roundings / f32 accumulation.
    w1f = params[0].astype(jnp.float32)
    w2f = params[2][:, :class_num].astype(jnp.float32)
    xb = x.astype(jnp.bfloat16).astype(jnp.float32)
    h_ref = jnp.maximum(xb @ w1f + b1, 0.0)
    ref = h_ref.astype(jnp.bfloat16).astype(jnp.float32) @ w2f + b2

    out_f32 = out.astype(jnp.float32)
    assert jnp.allclose(out_f32, ref, atol=5e-2, rtol=5e-2), (
        float(jnp.max(jnp.abs(out_f32 - ref))))

    print("KERNEL_OK")
</pallas_src>

<mosaic_0001>
module attributes {stable_mosaic.version = 11 : i64} {
  func.func @dnn_kernel(%arg0: i32, %arg1: memref<32x256xf32, #tpu.memory_space<vmem>>, %arg2: memref<256x128xbf16, #tpu.memory_space<vmem>>, %arg3: memref<1x128xf32, #tpu.memory_space<vmem>>, %arg4: memref<128x128xbf16, #tpu.memory_space<vmem>>, %arg5: memref<1x128xf32, #tpu.memory_space<vmem>>, %arg6: memref<32x128xbf16, #tpu.memory_space<vmem>>) attributes {dimension_semantics = [#tpu.dimension_semantics<parallel>], iteration_bounds = array<i64: 2>, scalar_prefetch = 0 : i64, scratch_operands = 0 : i64, tpu.core_type = #tpu.core_type<tc>, window_params = [{transform_indices = @transform_0, window_bounds = array<i64: 32, 256>}, {pipeline_mode = #tpu.pipeline_mode<synchronous>, transform_indices = @transform_1, window_bounds = array<i64: 256, 128>}, {pipeline_mode = #tpu.pipeline_mode<synchronous>, transform_indices = @transform_2, window_bounds = array<i64: 1, 128>}, {pipeline_mode = #tpu.pipeline_mode<synchronous>, transform_indices = @transform_3, window_bounds = array<i64: 128, 128>}, {pipeline_mode = #tpu.pipeline_mode<synchronous>, transform_indices = @transform_4, window_bounds = array<i64: 1, 128>}, {transform_indices = @transform_5, window_bounds = array<i64: 32, 128>}]} {
    %c0 = arith.constant 0 : index
    %c0_0 = arith.constant 0 : index
    %0 = vector.load %arg1[%c0, %c0_0] : memref<32x256xf32, #tpu.memory_space<vmem>>, vector<32x256xf32>
    %1 = arith.truncf %0 : vector<32x256xf32> to vector<32x256xbf16>
    %c0_1 = arith.constant 0 : index
    %c0_2 = arith.constant 0 : index
    %2 = vector.load %arg2[%c0_1, %c0_2] : memref<256x128xbf16, #tpu.memory_space<vmem>>, vector<256x128xbf16>
    %cst = arith.constant dense<0.000000e+00> : vector<32x128xf32>
    %3 = tpu.matmul %1, %2, %cst {dimension_numbers = #tpu.dot_dimension_numbers<[1], [0], [0], [1], [0, 0, 1, 1], [], []>} : vector<32x256xbf16>, vector<256x128xbf16>, vector<32x128xf32> -> vector<32x128xf32>
    %c0_3 = arith.constant 0 : index
    %c0_4 = arith.constant 0 : index
    %4 = vector.load %arg3[%c0_3, %c0_4] : memref<1x128xf32, #tpu.memory_space<vmem>>, vector<1x128xf32>
    %5 = vector.broadcast %4 : vector<1x128xf32> to vector<32x128xf32>
    %6 = arith.addf %3, %5 : vector<32x128xf32>
    %cst_5 = arith.constant 0.000000e+00 : f32
    %7 = vector.broadcast %cst_5 : f32 to vector<32x128xf32>
    %8 = arith.maximumf %6, %7 : vector<32x128xf32>
    %9 = arith.truncf %8 : vector<32x128xf32> to vector<32x128xbf16>
    %c0_6 = arith.constant 0 : index
    %c0_7 = arith.constant 0 : index
    %10 = vector.load %arg4[%c0_6, %c0_7] : memref<128x128xbf16, #tpu.memory_space<vmem>>, vector<128x128xbf16>
    %cst_8 = arith.constant dense<0.000000e+00> : vector<32x128xf32>
    %11 = tpu.matmul %9, %10, %cst_8 {dimension_numbers = #tpu.dot_dimension_numbers<[1], [0], [0], [1], [0, 0, 1, 1], [], []>} : vector<32x128xbf16>, vector<128x128xbf16>, vector<32x128xf32> -> vector<32x128xf32>
    %c0_9 = arith.constant 0 : index
    %c0_10 = arith.constant 0 : index
    %12 = vector.load %arg5[%c0_9, %c0_10] : memref<1x128xf32, #tpu.memory_space<vmem>>, vector<1x128xf32>
    %13 = vector.broadcast %12 : vector<1x128xf32> to vector<32x128xf32>
    %14 = arith.addf %11, %13 : vector<32x128xf32>
    %15 = arith.truncf %14 : vector<32x128xf32> to vector<32x128xbf16>
    %c0_11 = arith.constant 0 : index
    %c0_12 = arith.constant 0 : index
    %16 = vector.load %arg6[%c0_11, %c0_12] : memref<32x128xbf16, #tpu.memory_space<vmem>>, vector<32x128xbf16>
    tpu.vector_store %arg6[%c0_11, %c0_12], %15 {strides = array<i32>} : memref<32x128xbf16, #tpu.memory_space<vmem>>, vector<32x128xbf16>,
    return
  }
  func.func @transform_0(%arg0: i32) -> (i32, i32) {
    %c0_i32 = arith.constant 0 : i32
    %c0_i32_0 = arith.constant 0 : i32
    return %arg0, %c0_i32 : i32, i32
  }
  func.func @transform_1(%arg0: i32) -> (i32, i32) {
    %c0_i32 = arith.constant 0 : i32
    %c0_i32_0 = arith.constant 0 : i32
    %c0_i32_1 = arith.constant 0 : i32
    return %c0_i32, %c0_i32_0 : i32, i32
  }
  func.func @transform_2(%arg0: i32) -> (i32, i32) {
    %c0_i32 = arith.constant 0 : i32
    %c0_i32_0 = arith.constant 0 : i32
    %c0_i32_1 = arith.constant 0 : i32
    return %c0_i32, %c0_i32_0 : i32, i32
  }
  func.func @transform_3(%arg0: i32) -> (i32, i32) {
    %c0_i32 = arith.constant 0 : i32
    %c0_i32_0 = arith.constant 0 : i32
    %c0_i32_1 = arith.constant 0 : i32
    return %c0_i32, %c0_i32_0 : i32, i32
  }
  func.func @transform_4(%arg0: i32) -> (i32, i32) {
    %c0_i32 = arith.constant 0 : i32
    %c0_i32_0 = arith.constant 0 : i32
    %c0_i32_1 = arith.constant 0 : i32
    return %c0_i32, %c0_i32_0 : i32, i32
  }
  func.func @transform_5(%arg0: i32) -> (i32, i32) {
    %c0_i32 = arith.constant 0 : i32
    %c0_i32_0 = arith.constant 0 : i32
    return %arg0, %c0_i32 : i32, i32
  }
}

module attributes {stable_mosaic.version = 11 : i64} {
  func.func @dnn_kernel(%arg0: i32, %arg1: memref<32x256xf32, #tpu.memory_space<vmem>>, %arg2: memref<256x128xbf16, #tpu.memory_space<vmem>>, %arg3: memref<1x128xf32, #tpu.memory_space<vmem>>, %arg4: memref<128x128xbf16, #tpu.memory_space<vmem>>, %arg5: memref<1x128xf32, #tpu.memory_space<vmem>>, %arg6: memref<32x128xbf16, #tpu.memory_space<vmem>>) attributes {dimension_semantics = [#tpu.dimension_semantics<parallel>], iteration_bounds = array<i64: 2>, scalar_prefetch = 0 : i64, scratch_operands = 0 : i64, tpu.core_type = #tpu.core_type<tc>, window_params = [{transform_indices = @transform_0, window_bounds = array<i64: 32, 256>}, {pipeline_mode = #tpu.pipeline_mode<synchronous>, transform_indices = @transform_1, window_bounds = array<i64: 256, 128>}, {pipeline_mode = #tpu.pipeline_mode<synchronous>, transform_indices = @transform_2, window_bounds = array<i64: 1, 128>}, {pipeline_mode = #tpu.pipeline_mode<synchronous>, transform_indices = @transform_3, window_bounds = array<i64: 128, 128>}, {pipeline_mode = #tpu.pipeline_mode<synchronous>, transform_indices = @transform_4, window_bounds = array<i64: 1, 128>}, {transform_indices = @transform_5, window_bounds = array<i64: 32, 128>}]} {
    %c0 = arith.constant 0 : index
    %c0_0 = arith.constant 0 : index
    %0 = vector.load %arg1[%c0, %c0_0] : memref<32x256xf32, #tpu.memory_space<vmem>>, vector<32x256xf32>
    %1 = arith.truncf %0 : vector<32x256xf32> to vector<32x256xbf16>
    %c0_1 = arith.constant 0 : index
    %c0_2 = arith.constant 0 : index
    %2 = vector.load %arg2[%c0_1, %c0_2] : memref<256x128xbf16, #tpu.memory_space<vmem>>, vector<256x128xbf16>
    %cst = arith.constant dense<0.000000e+00> : vector<32x128xf32>
    %3 = tpu.matmul %1, %2, %cst {dimension_numbers = #tpu.dot_dimension_numbers<[1], [0], [0], [1], [0, 0, 1, 1], [], []>} : vector<32x256xbf16>, vector<256x128xbf16>, vector<32x128xf32> -> vector<32x128xf32>
    %c0_3 = arith.constant 0 : index
    %c0_4 = arith.constant 0 : index
    %4 = vector.load %arg3[%c0_3, %c0_4] : memref<1x128xf32, #tpu.memory_space<vmem>>, vector<1x128xf32>
    %5 = vector.broadcast %4 : vector<1x128xf32> to vector<32x128xf32>
    %6 = arith.addf %3, %5 : vector<32x128xf32>
    %cst_5 = arith.constant 0.000000e+00 : f32
    %7 = vector.broadcast %cst_5 : f32 to vector<32x128xf32>
    %8 = arith.maximumf %6, %7 : vector<32x128xf32>
    %9 = arith.truncf %8 : vector<32x128xf32> to vector<32x128xbf16>
    %c0_6 = arith.constant 0 : index
    %c0_7 = arith.constant 0 : index
    %10 = vector.load %arg4[%c0_6, %c0_7] : memref<128x128xbf16, #tpu.memory_space<vmem>>, vector<128x128xbf16>
    %cst_8 = arith.constant dense<0.000000e+00> : vector<32x128xf32>
    %11 = tpu.matmul %9, %10, %cst_8 {dimension_numbers = #tpu.dot_dimension_numbers<[1], [0], [0], [1], [0, 0, 1, 1], [], []>} : vector<32x128xbf16>, vector<128x128xbf16>, vector<32x128xf32> -> vector<32x128xf32>
    %c0_9 = arith.constant 0 : index
    %c0_10 = arith.constant 0 : index
    %12 = vector.load %arg5[%c0_9, %c0_10] : memref<1x128xf32, #tpu.memory_space<vmem>>, vector<1x128xf32>
    %13 = vector.broadcast %12 : vector<1x128xf32> to vector<32x128xf32>
    %14 = arith.addf %11, %13 : vector<32x128xf32>
    %15 = arith.truncf %14 : vector<32x128xf32> to vector<32x128xbf16>
    %c0_11 = arith.constant 0 : index
    %c0_12 = arith.constant 0 : index
    %16 = vector.load %arg6[%c0_11, %c0_12] : memref<32x128xbf16, #tpu.memory_space<vmem>>, vector<32x128xbf16>
    tpu.vector_store %arg6[%c0_11, %c0_12], %15 {strides = array<i32>} : memref<32x128xbf16, #tpu.memory_space<vmem>>, vector<32x128xbf16>,
    return
  }
  func.func @transform_0(%arg0: i32) -> (i32, i32) {
    %c0_i32 = arith.constant 0 : i32
    %c0_i32_0 = arith.constant 0 : i32
    return %arg0, %c0_i32 : i32, i32
  }
  func.func @transform_1(%arg0: i32) -> (i32, i32) {
    %c0_i32 = arith.constant 0 : i32
    %c0_i32_0 = arith.constant 0 : i32
    %c0_i32_1 = arith.constant 0 : i32
    return %c0_i32, %c0_i32_0 : i32, i32
  }
  func.func @transform_2(%arg0: i32) -> (i32, i32) {
    %c0_i32 = arith.constant 0 : i32
    %c0_i32_0 = arith.constant 0 : i32
    %c0_i32_1 = arith.constant 0 : i32
    return %c0_i32, %c0_i32_0 : i32, i32
  }
  func.func @transform_3(%arg0: i32) -> (i32, i32) {
    %c0_i32 = arith.constant 0 : i32
    %c0_i32_0 = arith.constant 0 : i32
    %c0_i32_1 = arith.constant 0 : i32
    return %c0_i32, %c0_i32_0 : i32, i32
  }
  func.func @transform_4(%arg0: i32) -> (i32, i32) {
    %c0_i32 = arith.constant 0 : i32
    %c0_i32_0 = arith.constant 0 : i32
    %c0_i32_1 = arith.constant 0 : i32
    return %c0_i32, %c0_i32_0 : i32, i32
  }
  func.func @transform_5(%arg0: i32) -> (i32, i32) {
    %c0_i32 = arith.constant 0 : i32
    %c0_i32_0 = arith.constant 0 : i32
    return %arg0, %c0_i32 : i32, i32
  }
}

</mosaic_0001>

<llo_original>
// kernel: dnn_forward.1
$region0: #{dnn_forward.1}
  #allocation0 [shape = 'u32[]', space=smem, size = 0x4, offset = 0x4, fixed_abs, tag = 'smem constant byte address 0x4 - core index']
  #allocation1 [shape = 'u32[144,128]{1,0:T(1,128)}', space=vmem, size = 0x12000, scoped, tag = 'internal scratch']
  %s0 = inlined_call_operand.hbm [shape: f32[64,256], index: 0, kind: input, shape index: {}]
  %s1 = inlined_call_operand.hbm [shape: bf16[256,128], index: 1, kind: input, shape index: {}]
  %s2 = inlined_call_operand.vmem [shape: f32[1,128], index: 2, kind: input, shape index: {}]
  %s3 = inlined_call_operand.hbm [shape: bf16[128,128], index: 3, kind: input, shape index: {}]
  %s4 = inlined_call_operand.vmem [shape: f32[1,128], index: 4, kind: input, shape index: {}]
  %s5 = inlined_call_operand.vmem [shape: bf16[64,128], index: 5, kind: output, shape index: {}]
  %s6 = sld [smem:[#allocation0]]
  $region65: #{dnn_forward.1} parent=0
    _
  %s8 = ssub.s32 1, %s6
  %s9 = scalar_select 0, %s8, %s6
  $region1: #{dnn_forward.1} parent=0
    #allocation2 [shape = 'u8[65536]{0}', space=vmem, size = 0x10000, scoped, tag = 'input window, operand 0']
    #allocation3 [shape = 's32[2]{0}', space=sflag, size = 0x8, scoped, tag = 'scoped memory for dnn_forward.1']
    #allocation4 [shape = 'u8[65536]{0}', space=vmem, size = 0x10000, scoped, tag = 'input window, operand 1, single buffered']
    #allocation5 [shape = 's32[1]{0}', space=sflag, size = 0x4, scoped, tag = 'scoped memory for dnn_forward.1']
    #allocation6 [shape = 'u8[32768]{0}', space=vmem, size = 0x8000, scoped, tag = 'input window, operand 3, single buffered']
    %10 = vsyncpa [#allocation3], 0
    %s11 = scalar_lea.sflag [#allocation3], 1
    %12 = vsyncpa %s11, 0
    %13 = vsyncpa [#allocation5], 0
    loop: start=0, step=1, limit=4
    $region2: #{dnn_forward.1} parent=1 // loop_pre_header
      _
    $region3: #{dnn_forward.1} parent=1 // loop_header
      %s15 = sphi 0, %s19
      %p16 = scmp.ge.s32.totalorder %s15, 4
      %s25 = sphi 0, %s27
      %s28 = sphi 0, %s25
      %s29 = sphi 0, %s28
      %s45 = sphi 0, %s29
      %s49 = sphi 0, %s49
      %s51 = sphi 0, %s49
      %s52 = sphi 0, %s51
      %s66 = sphi 0, %s52
      %s70 = sphi 0, %s70
      %s72 = sphi 0, %s70
      %s73 = sphi 0, %s72
      %s87 = sphi 0, %s73
      %s91 = sphi 0, %s91
      %s93 = sphi 0, %s91
      %s94 = sphi 0, %s93
      %s108 = sphi 0, %s94
      %s112 = sphi 0, %s112
      %s114 = sphi 0, %s112
      %s115 = sphi 0, %s114
      %s129 = sphi 0, %s115
      %s135 = sphi 0, %s137
      %s138 = sphi 0, %s135
      %s139 = sphi 0, %s138
      %s155 = sphi 0, %s139
    $region4: #{dnn_forward.1} parent=1 // loop_header_branch
      %18 = sbr.rel (%p16) target = $region8
    $region5: #{dnn_forward.1} parent=1 // loop_body
      %s20 = ssub.s32 %s15, 1
      %s21 = ssub.s32 %s15, 2
      %s22 = sadd.s32 %s15, 1
      %s23 = ssub.s32 %s15, %s22
      %p24 = scmp.eq.s32.totalorder %s23, 0
      %s26 = sadd.s32 %s25, 1
      %s27 = scalar_select %p24, %s25, %s26
      %p30 = pneg %p24
      %p31 = scmp.eq.s32.totalorder %s15, 1
      %p32 = por %p30, %p31
      %p33 = scmp.ne.s32.totalorder %s25, %s28
      %p34 = scmp.eq.s32.totalorder %s15, 0
      %p35 = por %p33, %p34
      %p36 = scmp.ne.s32.totalorder %s25, %s28
      %p37 = scmp.eq.s32.totalorder %s20, 1
      %p38 = por %p36, %p37
      %p39 = scmp.ne.s32.totalorder %s28, %s29
      %p40 = scmp.eq.s32.totalorder %s20, 0
      %p41 = por %p39, %p40
      %p42 = scmp.ne.s32.totalorder %s28, %s29
      %p43 = scmp.eq.s32.totalorder %s21, 1
      %p44 = por %p42, %p43
      %p46 = scmp.ne.s32.totalorder %s29, %s45
      %p47 = scmp.eq.s32.totalorder %s21, 0
      %p48 = por %p46, %p47
      %s50 = sadd.s32 %s49, 1
      %p53 = scmp.eq.s32.totalorder %s15, 1
      %p54 = scmp.ne.s32.totalorder %s49, %s51
      %p55 = scmp.eq.s32.totalorder %s15, 0
      %p56 = por %p54, %p55
      %p57 = scmp.ne.s32.totalorder %s49, %s51
      %p58 = scmp.eq.s32.totalorder %s20, 1
      %p59 = por %p57, %p58
      %p60 = scmp.ne.s32.totalorder %s51, %s52
      %p61 = scmp.eq.s32.totalorder %s20, 0
      %p62 = por %p60, %p61
      %p63 = scmp.ne.s32.totalorder %s51, %s52
      %p64 = scmp.eq.s32.totalorder %s21, 1
      %p65 = por %p63, %p64
      %p67 = scmp.ne.s32.totalorder %s52, %s66
      %p68 = scmp.eq.s32.totalorder %s21, 0
      %p69 = por %p67, %p68
      %s71 = sadd.s32 %s70, 1
      %p74 = scmp.eq.s32.totalorder %s15, 1
      %p75 = scmp.ne.s32.totalorder %s70, %s72
      %p76 = scmp.eq.s32.totalorder %s15, 0
      %p77 = por %p75, %p76
      %p78 = scmp.ne.s32.totalorder %s70, %s72
      %p79 = scmp.eq.s32.totalorder %s20, 1
      %p80 = por %p78, %p79
      %p81 = scmp.ne.s32.totalorder %s72, %s73
      %p82 = scmp.eq.s32.totalorder %s20, 0
      %p83 = por %p81, %p82
      %p84 = scmp.ne.s32.totalorder %s72, %s73
      %p85 = scmp.eq.s32.totalorder %s21, 1
      %p86 = por %p84, %p85
      %p88 = scmp.ne.s32.totalorder %s73, %s87
      %p89 = scmp.eq.s32.totalorder %s21, 0
      %p90 = por %p88, %p89
      %s92 = sadd.s32 %s91, 1
      %p95 = scmp.eq.s32.totalorder %s15, 1
      %p96 = scmp.ne.s32.totalorder %s91, %s93
      %p97 = scmp.eq.s32.totalorder %s15, 0
      %p98 = por %p96, %p97
      %p99 = scmp.ne.s32.totalorder %s91, %s93
      %p100 = scmp.eq.s32.totalorder %s20, 1
      %p101 = por %p99, %p100
      %p102 = scmp.ne.s32.totalorder %s93, %s94
      %p103 = scmp.eq.s32.totalorder %s20, 0
      %p104 = por %p102, %p103
      %p105 = scmp.ne.s32.totalorder %s93, %s94
      %p106 = scmp.eq.s32.totalorder %s21, 1
      %p107 = por %p105, %p106
      %p109 = scmp.ne.s32.totalorder %s94, %s108
      %p110 = scmp.eq.s32.totalorder %s21, 0
      %p111 = por %p109, %p110
      %s113 = sadd.s32 %s112, 1
      %p116 = scmp.eq.s32.totalorder %s15, 1
      %p117 = scmp.ne.s32.totalorder %s112, %s114
      %p118 = scmp.eq.s32.totalorder %s15, 0
      %p119 = por %p117, %p118
      %p120 = scmp.ne.s32.totalorder %s112, %s114
      %p121 = scmp.eq.s32.totalorder %s20, 1
      %p122 = por %p120, %p121
      %p123 = scmp.ne.s32.totalorder %s114, %s115
      %p124 = scmp.eq.s32.totalorder %s20, 0
      %p125 = por %p123, %p124
      %p126 = scmp.ne.s32.totalorder %s114, %s115
      %p127 = scmp.eq.s32.totalorder %s21, 1
      %p128 = por %p126, %p127
      %p130 = scmp.ne.s32.totalorder %s115, %s129
      %p131 = scmp.eq.s32.totalorder %s21, 0
      %p132 = por %p130, %p131
      %s133 = ssub.s32 %s15, %s22
      %p134 = scmp.eq.s32.totalorder %s133, 0
      %s136 = sadd.s32 %s135, 1
      %s137 = scalar_select %p134, %s135, %s136
      %p140 = pneg %p134
      %p141 = scmp.eq.s32.totalorder %s15, 1
      %p142 = por %p140, %p141
      %p143 = scmp.ne.s32.totalorder %s135, %s138
      %p144 = scmp.eq.s32.totalorder %s15, 0
      %p145 = por %p143, %p144
      %p146 = scmp.ne.s32.totalorder %s135, %s138
      %p147 = scmp.eq.s32.totalorder %s20, 1
      %p148 = por %p146, %p147
      %p149 = scmp.ne.s32.totalorder %s138, %s139
      %p150 = scmp.eq.s32.totalorder %s20, 0
      %p151 = por %p149, %p150
      %p152 = scmp.ne.s32.totalorder %s138, %s139
      %p153 = scmp.eq.s32.totalorder %s21, 1
      %p154 = por %p152, %p153
      %p156 = scmp.ne.s32.totalorder %s139, %s155
      %p157 = scmp.eq.s32.totalorder %s21, 0
      %p158 = por %p156, %p157
      %p159 = scmp.le.s32.totalorder 1, %s15
      %p160 = scmp.lt.s32.totalorder %s15, 3
      %p161 = pnand %p159, %p160
      %p162 = pneg %p161
      // Predicated region
      $region9: #{dnn_forward.1} parent=5 // pred_check
        _
      $region10: #{dnn_forward.1} parent=5 // pred_check_branch
        %164 = sbr.rel (%p161) target = $region12
      $region11: #{dnn_forward.1} parent=5 // pred_region
        %s165 = ssub.s32 %s15, 1
        // Predicated region
        $region13: #{dnn_forward.1} parent=11 // pred_check
          %p166 = pneg %p62
        $region14: #{dnn_forward.1} parent=11 // pred_check_branch
          %168 = sbr.rel (%p166) target = $region16
        $region15: #{dnn_forward.1} parent=11 // pred_region
          %s170 = ssub.s32 2048, 2048
          %171 = vsyncadd [#allocation5], %s170
          %s172 = sshll.u32 [#allocation4], 4
          %s173 = int_to_ptr.vmem [resolvable:$true] %s172
          %178 = dma.hbm_to_vmem [thread:$0]  %s1, 2048, %s173, [#allocation5], 64, 64, 4
        $region16: #{dnn_forward.1} parent=11 // pred_fallthru
          _
        // Predicated region
        $region17: #{dnn_forward.1} parent=11 // pred_check
          %p179 = pneg %p83
        $region18: #{dnn_forward.1} parent=11 // pred_check_branch
          %181 = sbr.rel (%p179) target = $region20
        $region19: #{dnn_forward.1} parent=11 // pred_region
          _
        $region20: #{dnn_forward.1} parent=11 // pred_fallthru
          _
        // Predicated region
        $region21: #{dnn_forward.1} parent=11 // pred_check
          %p182 = pneg %p104
        $region22: #{dnn_forward.1} parent=11 // pred_check_branch
          %184 = sbr.rel (%p182) target = $region24
        $region23: #{dnn_forward.1} parent=11 // pred_region
          %s186 = ssub.s32 1024, 1024
          %187 = vsyncadd [#allocation5], %s186
          %s188 = sshll.u32 [#allocation6], 4
          %s189 = int_to_ptr.vmem [resolvable:$true] %s188
          %194 = dma.hbm_to_vmem [thread:$0]  %s3, 1024, %s189, [#allocation5], 64, 64, 4
        $region24: #{dnn_forward.1} parent=11 // pred_fallthru
          _
        // Predicated region
        $region25: #{dnn_forward.1} parent=11 // pred_check
          %p195 = pneg %p125
        $region26: #{dnn_forward.1} parent=11 // pred_check_branch
          %197 = sbr.rel (%p195) target = $region28
        $region27: #{dnn_forward.1} parent=11 // pred_region
          _
        $region28: #{dnn_forward.1} parent=11 // pred_fallthru
          _
      $region12: #{dnn_forward.1} parent=5 // pred_fallthru
        _
      %p198 = scmp.lt.s32.totalorder %s15, 2
      // Predicated region
      $region29: #{dnn_forward.1} parent=5 // pred_check
        %p199 = pneg %p198
      $region30: #{dnn_forward.1} parent=5 // pred_check_branch
        %201 = sbr.rel (%p199) target = $region32
      $region31: #{dnn_forward.1} parent=5 // pred_region
        // Predicated region
        $region33: #{dnn_forward.1} parent=31 // pred_check
          %p202 = pneg %p35
        $region34: #{dnn_forward.1} parent=31 // pred_check_branch
          %204 = sbr.rel (%p202) target = $region36
        $region35: #{dnn_forward.1} parent=31 // pred_region
          %s205 = sand.u32 %s25, 1
          %s206 = scalar_lea.sflag [#allocation3], %s205
          %s207 = sand.u32 %s25, 1
          %s208 = smul.addr %s207, 64
          %s209 = scalar_lea.vmem [#allocation2], %s208
          %s210 = smul.u32 4, %s15
          %s212 = ssub.s32 1024, 1024
          %213 = vsyncadd %s206, %s212
          %s214 = smul.addr %s210, 2
          %s215 = smul.addr %s214, 128
          %s216 = scalar_lea.hbm %s0, %s215
          %s217 = sshll.u32 %s209, 4
          %s218 = int_to_ptr.vmem [resolvable:$true] %s217
          %223 = dma.hbm_to_vmem [thread:$0]  %s216, 1024, %s218, %s206, 256, 256, 16
        $region36: #{dnn_forward.1} parent=31 // pred_fallthru
          _
      $region32: #{dnn_forward.1} parent=5 // pred_fallthru
        _
      %p224 = scmp.le.s32.totalorder 1, %s15
      %p225 = scmp.lt.s32.totalorder %s15, 3
      %p226 = pnand %p224, %p225
      %p227 = pneg %p226
      // Predicated region
      $region37: #{dnn_forward.1} parent=5 // pred_check
        _
      $region38: #{dnn_forward.1} parent=5 // pred_check_branch
        %229 = sbr.rel (%p226) target = $region40
      $region39: #{dnn_forward.1} parent=5 // pred_region
        %s230 = ssub.s32 %s15, 1
        %s231 = sand.u32 %s28, 1
        %s232 = scalar_lea.sflag [#allocation3], %s231
        %s233 = sand.u32 %s28, 1
        %s234 = smul.addr %s233, 64
        %s235 = scalar_lea.vmem [#allocation2], %s234
        // Predicated region
        $region41: #{dnn_forward.1} parent=39 // pred_check
          %p236 = pneg %p41
        $region42: #{dnn_forward.1} parent=39 // pred_check_branch
          %238 = sbr.rel (%p236) target = $region44
        $region43: #{dnn_forward.1} parent=39 // pred_region
          %239 = dma.done %s232, 1024
        $region44: #{dnn_forward.1} parent=39 // pred_fallthru
          _
        // Predicated region
        $region45: #{dnn_forward.1} parent=39 // pred_check
          %p240 = pneg %p62
        $region46: #{dnn_forward.1} parent=39 // pred_check_branch
          %242 = sbr.rel (%p240) target = $region48
        $region47: #{dnn_forward.1} parent=39 // pred_region
          %243 = dma.done [#allocation5], 2048
        $region48: #{dnn_forward.1} parent=39 // pred_fallthru
          _
        // Predicated region
        $region49: #{dnn_forward.1} parent=39 // pred_check
          %p244 = pneg %p104
        $region50: #{dnn_forward.1} parent=39 // pred_check_branch
          %246 = sbr.rel (%p244) target = $region52
        $region51: #{dnn_forward.1} parent=39 // pred_region
          %247 = dma.done [#allocation5], 1024
        $region52: #{dnn_forward.1} parent=39 // pred_fallthru
          _
        %s248 = sand.u32 %s28, 1
        %s249 = scalar_lea.sflag [#allocation3], %s248
        %s250 = sand.u32 %s28, 1
        %s251 = smul.addr %s250, 64
        %s252 = scalar_lea.vmem [#allocation2], %s251
        %p253 = pneg %p41
        %p254 = pneg %p38
        %p255 = pneg %p62
        %p256 = pneg %p59
        %p257 = pneg %p83
        %p258 = pneg %p80
        %p259 = pneg %p104
        %p260 = pneg %p101
        %p261 = pneg %p125
        %p262 = pneg %p122
        %p263 = pneg %p151
        %p264 = pneg %p148
        %s265 = smul.u32 4, %s20
        %p266 = scmp.lt.s32.totalorder %s265, 7
        %s267 = scalar_select %p266, %s265, 7
        %s268 = smul.addr %s267, 4
        %s269 = scalar_lea.vmem %s5, %s268
        %s270 = smul.u32 4, %s20
        %s271 = smul.u32 4, %s20
        %p272 = scmp.lt.s32.totalorder %s271, 7
        %s273 = scalar_select %p272, %s271, 7
        %s274 = smul.addr %s273, 4
        %s275 = scalar_lea.vmem %s5, %s274
        %s276 = smul.u32 4, %s20
        %v278 = vld [vmem:[%s235] sm:$0xff]
        %v279 = vld [vmem:[%s235 + $0x8] sm:$0xff]
        %v280 = vld [vmem:[%s235 + $0x10] sm:$0xff]
        %v281 = vld [vmem:[%s235 + $0x18] sm:$0xff]
        %v282 = vld [vmem:[%s235 + $0x20] sm:$0xff]
        %v283 = vld [vmem:[%s235 + $0x28] sm:$0xff]
        %v284 = vld [vmem:[%s235 + $0x30] sm:$0xff]
        %v285 = vld [vmem:[%s235 + $0x38] sm:$0xff]
        %v286 = vpack.c.bf16 %v280, %v278
        %v287 = vpack.c.bf16 %v281, %v279
        %v288 = vpack.c.bf16 %v284, %v282
        %v289 = vpack.c.bf16 %v285, %v283
        %v290 = vld [vmem:[#allocation4] sm:$0xf]
        %v291 = vld [vmem:[#allocation4 + $0x4] sm:$0xf]
        %v292 = vld [vmem:[#allocation4 + $0x8] sm:$0xf]
        %v293 = vld [vmem:[#allocation4 + $0xc] sm:$0xf]
        %v294 = vld [vmem:[#allocation4 + $0x10] sm:$0xf]
        %v295 = vld [vmem:[#allocation4 + $0x14] sm:$0xf]
        %v296 = vld [vmem:[#allocation4 + $0x18] sm:$0xf]
        %v297 = vld [vmem:[#allocation4 + $0x1c] sm:$0xf]
        %v298 = vld [vmem:[#allocation4 + $0x20] sm:$0xf]
        %v299 = vld [vmem:[#allocation4 + $0x24] sm:$0xf]
        %v300 = vld [vmem:[#allocation4 + $0x28] sm:$0xf]
        %v301 = vld [vmem:[#allocation4 + $0x2c] sm:$0xf]
        %v302 = vld [vmem:[#allocation4 + $0x30] sm:$0xf]
        %v303 = vld [vmem:[#allocation4 + $0x34] sm:$0xf]
        %v304 = vld [vmem:[#allocation4 + $0x38] sm:$0xf]
        %v305 = vld [vmem:[#allocation4 + $0x3c] sm:$0xf]
        %v306 = vld [vmem:[#allocation4 + $0x40] sm:$0xf]
        %v307 = vld [vmem:[#allocation4 + $0x44] sm:$0xf]
        %v308 = vld [vmem:[#allocation4 + $0x48] sm:$0xf]
        %v309 = vld [vmem:[#allocation4 + $0x4c] sm:$0xf]
        %v310 = vld [vmem:[#allocation4 + $0x50] sm:$0xf]
        %v311 = vld [vmem:[#allocation4 + $0x54] sm:$0xf]
        %v312 = vld [vmem:[#allocation4 + $0x58] sm:$0xf]
        %v313 = vld [vmem:[#allocation4 + $0x5c] sm:$0xf]
        %v314 = vld [vmem:[#allocation4 + $0x60] sm:$0xf]
        %v315 = vld [vmem:[#allocation4 + $0x64] sm:$0xf]
        %v316 = vld [vmem:[#allocation4 + $0x68] sm:$0xf]
        %v317 = vld [vmem:[#allocation4 + $0x6c] sm:$0xf]
        %v318 = vld [vmem:[#allocation4 + $0x70] sm:$0xf]
        %v319 = vld [vmem:[#allocation4 + $0x74] sm:$0xf]
        %v320 = vld [vmem:[#allocation4 + $0x78] sm:$0xf]
        %v321 = vld [vmem:[#allocation4 + $0x7c] sm:$0xf]
        %v322 = vld [vmem:[%s2] sm:$0x1]
        %v324 = vlaneseq
        %v325 = vshrl.u32 %v324, 7
        %v326 = vsub.s32 0, %v325
        %v327 = vrot.slane %v322, %v326
        %v361 = vunpack.c.l.b16 %v290
        %v362 = vunpack.c.l.b16 %v291
        %v363 = vunpack.c.l.b16 %v292
        %v364 = vunpack.c.l.b16 %v293
        %v365 = vunpack.c.l.b16 %v294
        %v366 = vunpack.c.l.b16 %v295
        %v367 = vunpack.c.l.b16 %v296
        %v368 = vunpack.c.l.b16 %v297
        %v369 = vunpack.c.l.b16 %v298
        %v370 = vunpack.c.l.b16 %v299
        %v371 = vunpack.c.l.b16 %v300
        %v372 = vunpack.c.l.b16 %v301
        %v373 = vunpack.c.l.b16 %v302
        %v374 = vunpack.c.l.b16 %v303
        %v375 = vunpack.c.l.b16 %v304
        %v376 = vunpack.c.l.b16 %v305
        %v377 = vunpack.c.l.b16 %v306
        %v378 = vunpack.c.l.b16 %v307
        %v379 = vunpack.c.l.b16 %v308
        %v380 = vunpack.c.l.b16 %v309
        %v381 = vunpack.c.l.b16 %v310
        %v382 = vunpack.c.l.b16 %v311
        %v383 = vunpack.c.l.b16 %v312
        %v384 = vunpack.c.l.b16 %v313
        %v385 = vunpack.c.l.b16 %v314
        %v386 = vunpack.c.l.b16 %v315
        %v387 = vunpack.c.l.b16 %v316
        %v388 = vunpack.c.l.b16 %v317
        %v389 = vunpack.c.l.b16 %v318
        %v390 = vunpack.c.l.b16 %v319
        %v391 = vunpack.c.l.b16 %v320
        %v392 = vunpack.c.l.b16 %v321
        %v393 = vpack.c.b16 %v362, %v361
        %v394 = vpack.c.b16 %v364, %v363
        %v395 = vpack.c.b16 %v366, %v365
        %v396 = vpack.c.b16 %v368, %v367
        %v397 = vpack.c.b16 %v370, %v369
        %v398 = vpack.c.b16 %v372, %v371
        %v399 = vpack.c.b16 %v374, %v373
        %v400 = vpack.c.b16 %v376, %v375
        %v401 = vpack.c.b16 %v378, %v377
        %v402 = vpack.c.b16 %v380, %v379
        %v403 = vpack.c.b16 %v382, %v381
        %v404 = vpack.c.b16 %v384, %v383
        %v405 = vpack.c.b16 %v386, %v385
        %v406 = vpack.c.b16 %v388, %v387
        %v407 = vpack.c.b16 %v390, %v389
        %v408 = vpack.c.b16 %v392, %v391
        %425 = vmatprep.subr.bf16.mxu0 0
        %426 = vmatpush1.bf16.msra.mxu0 %v393
        %427 = vmatprep.subr.bf16.mxu0 0
        %428 = vmatpush1.bf16.msra.mxu0 %v394
        %429 = vmatprep.subr.bf16.mxu0 0
        %430 = vmatpush1.bf16.msra.mxu0 %v395
        %431 = vmatprep.subr.bf16.mxu0 0
        %432 = vmatpush1.bf16.msra.mxu0 %v396
        %433 = vmatprep.subr.bf16.mxu0 0
        %434 = vmatpush1.bf16.msra.mxu0 %v397
        %435 = vmatprep.subr.bf16.mxu0 0
        %436 = vmatpush1.bf16.msra.mxu0 %v398
        %437 = vmatprep.subr.bf16.mxu0 0
        %438 = vmatpush1.bf16.msra.mxu0 %v399
        %439 = vmatprep.subr.bf16.mxu0 0
        %440 = vmatpush1.bf16.msra.mxu0 %v400
        %441 = vmatprep.subr.bf16.mxu0 0
        %442 = vmatpush1.bf16.msra.mxu0 %v401
        %443 = vmatprep.subr.bf16.mxu0 0
        %444 = vmatpush1.bf16.msra.mxu0 %v402
        %445 = vmatprep.subr.bf16.mxu0 0
        %446 = vmatpush1.bf16.msra.mxu0 %v403
        %447 = vmatprep.subr.bf16.mxu0 0
        %448 = vmatpush1.bf16.msra.mxu0 %v404
        %449 = vmatprep.subr.bf16.mxu0 0
        %450 = vmatpush1.bf16.msra.mxu0 %v405
        %451 = vmatprep.subr.bf16.mxu0 0
        %452 = vmatpush1.bf16.msra.mxu0 %v406
        %453 = vmatprep.subr.bf16.mxu0 0
        %454 = vmatpush1.bf16.msra.mxu0 %v407
        %455 = vmatprep.subr.bf16.mxu0 0
        %456 = vmatpush1.bf16.msra.mxu0 %v408
        %457 = vmatprep.mubr.bf16.mxu0 %v287
        %458 = vmatmul.mubr.bf16.gmra.mrb[0].mxu0 %v286
        %v459 = vpop.f32.mrb[0].mxu0
        %v460 = vadd.f32 %v327, %v459
        %v461 = vpop.f32.mrb[0].mxu0
        %v462 = vpop.f32.mrb[0].mxu0
        %v463 = vadd.f32 %v327, %v462
        %v464 = vpop.f32.mrb[0].mxu0
        %465 = vmatprep.mubr.bf16.mxu0 %v289
        %466 = vmatmul.mubr.bf16.gmra.mrb[0].mxu0 %v288
        %v467 = vpop.f32.mrb[0].mxu0
        %v468 = vadd.f32 %v327, %v467
        %v469 = vpop.f32.mrb[0].mxu0
        %v470 = vpop.f32.mrb[0].mxu0
        %v471 = vadd.f32 %v327, %v470
        %v472 = vpop.f32.mrb[0].mxu0
        %473 = vdwg.mxu0
        %v474 = vmax.f32 %v460, 0.0
        %v475 = vmax.f32 %v463, 0.0
        %v476 = vmax.f32 %v468, 0.0
        %v477 = vmax.f32 %v471, 0.0
        %v478 = vpack.c.bf16 %v475, %v474
        %v479 = vpack.c.bf16 %v477, %v476
        %v480 = vld [vmem:[#allocation6] sm:$0xf]
        %v481 = vld [vmem:[#allocation6 + $0x4] sm:$0xf]
        %v482 = vld [vmem:[#allocation6 + $0x8] sm:$0xf]
        %v483 = vld [vmem:[#allocation6 + $0xc] sm:$0xf]
        %v484 = vld [vmem:[#allocation6 + $0x10] sm:$0xf]
        %v485 = vld [vmem:[#allocation6 + $0x14] sm:$0xf]
        %v486 = vld [vmem:[#allocation6 + $0x18] sm:$0xf]
        %v487 = vld [vmem:[#allocation6 + $0x1c] sm:$0xf]
        %v488 = vld [vmem:[#allocation6 + $0x20] sm:$0xf]
        %v489 = vld [vmem:[#allocation6 + $0x24] sm:$0xf]
        %v490 = vld [vmem:[#allocation6 + $0x28] sm:$0xf]
        %v491 = vld [vmem:[#allocation6 + $0x2c] sm:$0xf]
        %v492 = vld [vmem:[#allocation6 + $0x30] sm:$0xf]
        %v493 = vld [vmem:[#allocation6 + $0x34] sm:$0xf]
        %v494 = vld [vmem:[#allocation6 + $0x38] sm:$0xf]
        %v495 = vld [vmem:[#allocation6 + $0x3c] sm:$0xf]
        %v496 = vld [vmem:[%s4] sm:$0x1]
        %v498 = vlaneseq
        %v499 = vshrl.u32 %v498, 7
        %v500 = vsub.s32 0, %v499
        %v501 = vrot.slane %v496, %v500
        %v519 = vunpack.c.l.b16 %v480
        %v520 = vunpack.c.l.b16 %v481
        %v521 = vunpack.c.l.b16 %v482
        %v522 = vunpack.c.l.b16 %v483
        %v523 = vunpack.c.l.b16 %v484
        %v524 = vunpack.c.l.b16 %v485
        %v525 = vunpack.c.l.b16 %v486
        %v526 = vunpack.c.l.b16 %v487
        %v527 = vunpack.c.l.b16 %v488
        %v528 = vunpack.c.l.b16 %v489
        %v529 = vunpack.c.l.b16 %v490
        %v530 = vunpack.c.l.b16 %v491
        %v531 = vunpack.c.l.b16 %v492
        %v532 = vunpack.c.l.b16 %v493
        %v533 = vunpack.c.l.b16 %v494
        %v534 = vunpack.c.l.b16 %v495
        %v535 = vpack.c.b16 %v520, %v519
        %v536 = vpack.c.b16 %v522, %v521
        %v537 = vpack.c.b16 %v524, %v523
        %v538 = vpack.c.b16 %v526, %v525
        %v539 = vpack.c.b16 %v528, %v527
        %v540 = vpack.c.b16 %v530, %v529
        %v541 = vpack.c.b16 %v532, %v531
        %v542 = vpack.c.b16 %v534, %v533
        %551 = vmatprep.subr.bf16.mxu0 0
        %552 = vmatpush1.bf16.msra.mxu0 %v535
        %553 = vmatprep.subr.bf16.mxu0 0
        %554 = vmatpush1.bf16.msra.mxu0 %v536
        %555 = vmatprep.subr.bf16.mxu0 0
        %556 = vmatpush1.bf16.msra.mxu0 %v537
        %557 = vmatprep.subr.bf16.mxu0 0
        %558 = vmatpush1.bf16.msra.mxu0 %v538
        %559 = vmatprep.subr.bf16.mxu0 0
        %560 = vmatpush1.bf16.msra.mxu0 %v539
        %561 = vmatprep.subr.bf16.mxu0 0
        %562 = vmatpush1.bf16.msra.mxu0 %v540
        %563 = vmatprep.subr.bf16.mxu0 0
        %564 = vmatpush1.bf16.msra.mxu0 %v541
        %565 = vmatprep.subr.bf16.mxu0 0
        %566 = vmatpush1.bf16.msra.mxu0 %v542
        %567 = vmatprep.subr.bf16.mxu0 0
        %568 = vmatpush1.bf16.msra.mxu0 0
        %569 = vmatprep.subr.bf16.mxu0 0
        %570 = vmatpush1.bf16.msra.mxu0 0
        %571 = vmatprep.subr.bf16.mxu0 0
        %572 = vmatpush1.bf16.msra.mxu0 0
        %573 = vmatprep.subr.bf16.mxu0 0
        %574 = vmatpush1.bf16.msra.mxu0 0
        %575 = vmatprep.subr.bf16.mxu0 0
        %576 = vmatpush1.bf16.msra.mxu0 0
        %577 = vmatprep.subr.bf16.mxu0 0
        %578 = vmatpush1.bf16.msra.mxu0 0
        %579 = vmatprep.subr.bf16.mxu0 0
        %580 = vmatpush1.bf16.msra.mxu0 0
        %581 = vmatprep.subr.bf16.mxu0 0
        %582 = vmatpush1.bf16.msra.mxu0 0
        %583 = vmatprep.mubr.bf16.mxu0 0
        %584 = vmatmul.mubr.bf16.gmra.mrb[0].mxu0 %v478
        %v585 = vpop.f32.mrb[0].mxu0
        %v586 = vadd.f32 %v501, %v585
        %v587 = vpop.f32.mrb[0].mxu0
        %v588 = vpop.f32.mrb[0].mxu0
        %v589 = vadd.f32 %v501, %v588
        %v590 = vpop.f32.mrb[0].mxu0
        %591 = vmatprep.mubr.bf16.mxu0 0
        %592 = vmatmul.mubr.bf16.gmra.mrb[0].mxu0 %v479
        %v593 = vpop.f32.mrb[0].mxu0
        %v594 = vadd.f32 %v501, %v593
        %v595 = vpop.f32.mrb[0].mxu0
        %v596 = vpop.f32.mrb[0].mxu0
        %v597 = vadd.f32 %v501, %v596
        %v598 = vpop.f32.mrb[0].mxu0
        %599 = vdwg.mxu0
        %v600 = vpack.c.bf16 %v589, %v586
        %v601 = vpack.c.bf16 %v597, %v594
        %v604 = vunpack.c.l.b16 %v600
        %v605 = vunpack.c.h.b16 %v600
        %v606 = vunpack.c.l.b16 %v601
        %v607 = vunpack.c.h.b16 %v601
        %v608 = vpack.c.b16 %v604, %v604
        %v609 = vpack.c.b16 %v605, %v605
        %v610 = vpack.c.b16 %v606, %v606
        %v611 = vpack.c.b16 %v607, %v607
        %616 = vst [vmem:[%s275] sm:$0xf] %v608
        %617 = vst [vmem:[%s275 + $0x4] sm:$0xf] %v609
        %618 = vst [vmem:[%s275 + $0x8] sm:$0xf] %v610
        %619 = vst [vmem:[%s275 + $0xc] sm:$0xf] %v611
        %s620 = smul.u32 4, %s20
        %p621 = scmp.lt.s32.totalorder %s620, 7
        %s622 = scalar_select %p621, %s620, 7
        %s623 = smul.addr %s622, 4
        %s624 = scalar_lea.vmem %s5, %s623
        // Predicated region
        $region53: #{dnn_forward.1} parent=39 // pred_check
          %p625 = pneg %p148
        $region54: #{dnn_forward.1} parent=39 // pred_check_branch
          %627 = sbr.rel (%p625) target = $region56
        $region55: #{dnn_forward.1} parent=39 // pred_region
          %s628 = smul.u32 4, %s20
        $region56: #{dnn_forward.1} parent=39 // pred_fallthru
          _
      $region40: #{dnn_forward.1} parent=5 // pred_fallthru
        _
      %p629 = scmp.le.s32.totalorder 2, %s15
      // Predicated region
      $region57: #{dnn_forward.1} parent=5 // pred_check
        %p630 = pneg %p629
      $region58: #{dnn_forward.1} parent=5 // pred_check_branch
        %632 = sbr.rel (%p630) target = $region60
      $region59: #{dnn_forward.1} parent=5 // pred_region
        %s633 = ssub.s32 %s15, 2
        // Predicated region
        $region61: #{dnn_forward.1} parent=59 // pred_check
          %p634 = pneg %p154
        $region62: #{dnn_forward.1} parent=59 // pred_check_branch
          %636 = sbr.rel (%p634) target = $region64
        $region63: #{dnn_forward.1} parent=59 // pred_region
          %s637 = smul.u32 4, %s21
          %p638 = scmp.lt.s32.totalorder %s637, 7
          %s639 = scalar_select %p638, %s637, 7
          %s640 = smul.addr %s639, 4
          %s641 = scalar_lea.vmem %s5, %s640
        $region64: #{dnn_forward.1} parent=59 // pred_fallthru
          _
      $region60: #{dnn_forward.1} parent=5 // pred_fallthru
        _
    $region6: #{dnn_forward.1} parent=1 // loop_footer
      %s19 = sadd.s32 1, %s15
    $region7: #{dnn_forward.1} parent=1 // loop_footer_branch
      %14 = sbr.rel target = $region3
    $region8: #{dnn_forward.1} parent=1 // loop_exit
      _
    %642 = vsyncpa [#allocation3], 1
    %s643 = scalar_lea.sflag [#allocation3], 1
    %644 = vsyncpa %s643, 1
    %645 = vsyncpa [#allocation5], 1

// kernel: dnn_forward.1
$region0: #{dnn_forward.1}
  #allocation0 [shape = 'u32[]', space=smem, size = 0x4, offset = 0x4, fixed_abs, tag = 'smem constant byte address 0x4 - core index']
  #allocation1 [shape = 'u32[144,128]{1,0:T(1,128)}', space=vmem, size = 0x12000, scoped, tag = 'internal scratch']
  %s0 = inlined_call_operand.hbm [shape: f32[64,256], index: 0, kind: input, shape index: {}]
  %s1 = inlined_call_operand.hbm [shape: bf16[256,128], index: 1, kind: input, shape index: {}]
  %s2 = inlined_call_operand.vmem [shape: f32[1,128], index: 2, kind: input, shape index: {}]
  %s3 = inlined_call_operand.hbm [shape: bf16[128,128], index: 3, kind: input, shape index: {}]
  %s4 = inlined_call_operand.vmem [shape: f32[1,128], index: 4, kind: input, shape index: {}]
  %s5 = inlined_call_operand.vmem [shape: bf16[64,128], index: 5, kind: output, shape index: {}]
  %s6 = sld [smem:[#allocation0]]
  $region65: #{dnn_forward.1} parent=0
    _
  %s8 = ssub.s32 1, %s6
  %s9 = scalar_select 0, %s8, %s6
  $region1: #{dnn_forward.1} parent=0
    #allocation2 [shape = 'u8[65536]{0}', space=vmem, size = 0x10000, scoped, tag = 'input window, operand 0']
    #allocation3 [shape = 's32[2]{0}', space=sflag, size = 0x8, scoped, tag = 'scoped memory for dnn_forward.1']
    #allocation4 [shape = 'u8[65536]{0}', space=vmem, size = 0x10000, scoped, tag = 'input window, operand 1, single buffered']
    #allocation5 [shape = 's32[1]{0}', space=sflag, size = 0x4, scoped, tag = 'scoped memory for dnn_forward.1']
    #allocation6 [shape = 'u8[32768]{0}', space=vmem, size = 0x8000, scoped, tag = 'input window, operand 3, single buffered']
    %10 = vsyncpa [#allocation3], 0
    %s11 = scalar_lea.sflag [#allocation3], 1
    %12 = vsyncpa %s11, 0
    %13 = vsyncpa [#allocation5], 0
    loop: start=0, step=1, limit=4
    $region2: #{dnn_forward.1} parent=1 // loop_pre_header
      _
    $region3: #{dnn_forward.1} parent=1 // loop_header
      %s15 = sphi 0, %s19
      %p16 = scmp.ge.s32.totalorder %s15, 4
      %s25 = sphi 0, %s27
      %s28 = sphi 0, %s25
      %s29 = sphi 0, %s28
      %s45 = sphi 0, %s29
      %s49 = sphi 0, %s49
      %s51 = sphi 0, %s49
      %s52 = sphi 0, %s51
      %s66 = sphi 0, %s52
      %s70 = sphi 0, %s70
      %s72 = sphi 0, %s70
      %s73 = sphi 0, %s72
      %s87 = sphi 0, %s73
      %s91 = sphi 0, %s91
      %s93 = sphi 0, %s91
      %s94 = sphi 0, %s93
      %s108 = sphi 0, %s94
      %s112 = sphi 0, %s112
      %s114 = sphi 0, %s112
      %s115 = sphi 0, %s114
      %s129 = sphi 0, %s115
      %s135 = sphi 0, %s137
      %s138 = sphi 0, %s135
      %s139 = sphi 0, %s138
      %s155 = sphi 0, %s139
    $region4: #{dnn_forward.1} parent=1 // loop_header_branch
      %18 = sbr.rel (%p16) target = $region8
    $region5: #{dnn_forward.1} parent=1 // loop_body
      %s20 = ssub.s32 %s15, 1
      %s21 = ssub.s32 %s15, 2
      %s22 = sadd.s32 %s15, 1
      %s23 = ssub.s32 %s15, %s22
      %p24 = scmp.eq.s32.totalorder %s23, 0
      %s26 = sadd.s32 %s25, 1
      %s27 = scalar_select %p24, %s25, %s26
      %p30 = pneg %p24
      %p31 = scmp.eq.s32.totalorder %s15, 1
      %p32 = por %p30, %p31
      %p33 = scmp.ne.s32.totalorder %s25, %s28
      %p34 = scmp.eq.s32.totalorder %s15, 0
      %p35 = por %p33, %p34
      %p36 = scmp.ne.s32.totalorder %s25, %s28
      %p37 = scmp.eq.s32.totalorder %s20, 1
      %p38 = por %p36, %p37
      %p39 = scmp.ne.s32.totalorder %s28, %s29
      %p40 = scmp.eq.s32.totalorder %s20, 0
      %p41 = por %p39, %p40
      %p42 = scmp.ne.s32.totalorder %s28, %s29
      %p43 = scmp.eq.s32.totalorder %s21, 1
      %p44 = por %p42, %p43
      %p46 = scmp.ne.s32.totalorder %s29, %s45
      %p47 = scmp.eq.s32.totalorder %s21, 0
      %p48 = por %p46, %p47
      %s50 = sadd.s32 %s49, 1
      %p53 = scmp.eq.s32.totalorder %s15, 1
      %p54 = scmp.ne.s32.totalorder %s49, %s51
      %p55 = scmp.eq.s32.totalorder %s15, 0
      %p56 = por %p54, %p55
      %p57 = scmp.ne.s32.totalorder %s49, %s51
      %p58 = scmp.eq.s32.totalorder %s20, 1
      %p59 = por %p57, %p58
      %p60 = scmp.ne.s32.totalorder %s51, %s52
      %p61 = scmp.eq.s32.totalorder %s20, 0
      %p62 = por %p60, %p61
      %p63 = scmp.ne.s32.totalorder %s51, %s52
      %p64 = scmp.eq.s32.totalorder %s21, 1
      %p65 = por %p63, %p64
      %p67 = scmp.ne.s32.totalorder %s52, %s66
      %p68 = scmp.eq.s32.totalorder %s21, 0
      %p69 = por %p67, %p68
      %s71 = sadd.s32 %s70, 1
      %p74 = scmp.eq.s32.totalorder %s15, 1
      %p75 = scmp.ne.s32.totalorder %s70, %s72
      %p76 = scmp.eq.s32.totalorder %s15, 0
      %p77 = por %p75, %p76
      %p78 = scmp.ne.s32.totalorder %s70, %s72
      %p79 = scmp.eq.s32.totalorder %s20, 1
      %p80 = por %p78, %p79
      %p81 = scmp.ne.s32.totalorder %s72, %s73
      %p82 = scmp.eq.s32.totalorder %s20, 0
      %p83 = por %p81, %p82
      %p84 = scmp.ne.s32.totalorder %s72, %s73
      %p85 = scmp.eq.s32.totalorder %s21, 1
      %p86 = por %p84, %p85
      %p88 = scmp.ne.s32.totalorder %s73, %s87
      %p89 = scmp.eq.s32.totalorder %s21, 0
      %p90 = por %p88, %p89
      %s92 = sadd.s32 %s91, 1
      %p95 = scmp.eq.s32.totalorder %s15, 1
      %p96 = scmp.ne.s32.totalorder %s91, %s93
      %p97 = scmp.eq.s32.totalorder %s15, 0
      %p98 = por %p96, %p97
      %p99 = scmp.ne.s32.totalorder %s91, %s93
      %p100 = scmp.eq.s32.totalorder %s20, 1
      %p101 = por %p99, %p100
      %p102 = scmp.ne.s32.totalorder %s93, %s94
      %p103 = scmp.eq.s32.totalorder %s20, 0
      %p104 = por %p102, %p103
      %p105 = scmp.ne.s32.totalorder %s93, %s94
      %p106 = scmp.eq.s32.totalorder %s21, 1
      %p107 = por %p105, %p106
      %p109 = scmp.ne.s32.totalorder %s94, %s108
      %p110 = scmp.eq.s32.totalorder %s21, 0
      %p111 = por %p109, %p110
      %s113 = sadd.s32 %s112, 1
      %p116 = scmp.eq.s32.totalorder %s15, 1
      %p117 = scmp.ne.s32.totalorder %s112, %s114
      %p118 = scmp.eq.s32.totalorder %s15, 0
      %p119 = por %p117, %p118
      %p120 = scmp.ne.s32.totalorder %s112, %s114
      %p121 = scmp.eq.s32.totalorder %s20, 1
      %p122 = por %p120, %p121
      %p123 = scmp.ne.s32.totalorder %s114, %s115
      %p124 = scmp.eq.s32.totalorder %s20, 0
      %p125 = por %p123, %p124
      %p126 = scmp.ne.s32.totalorder %s114, %s115
      %p127 = scmp.eq.s32.totalorder %s21, 1
      %p128 = por %p126, %p127
      %p130 = scmp.ne.s32.totalorder %s115, %s129
      %p131 = scmp.eq.s32.totalorder %s21, 0
      %p132 = por %p130, %p131
      %s133 = ssub.s32 %s15, %s22
      %p134 = scmp.eq.s32.totalorder %s133, 0
      %s136 = sadd.s32 %s135, 1
      %s137 = scalar_select %p134, %s135, %s136
      %p140 = pneg %p134
      %p141 = scmp.eq.s32.totalorder %s15, 1
      %p142 = por %p140, %p141
      %p143 = scmp.ne.s32.totalorder %s135, %s138
      %p144 = scmp.eq.s32.totalorder %s15, 0
      %p145 = por %p143, %p144
      %p146 = scmp.ne.s32.totalorder %s135, %s138
      %p147 = scmp.eq.s32.totalorder %s20, 1
      %p148 = por %p146, %p147
      %p149 = scmp.ne.s32.totalorder %s138, %s139
      %p150 = scmp.eq.s32.totalorder %s20, 0
      %p151 = por %p149, %p150
      %p152 = scmp.ne.s32.totalorder %s138, %s139
      %p153 = scmp.eq.s32.totalorder %s21, 1
      %p154 = por %p152, %p153
      %p156 = scmp.ne.s32.totalorder %s139, %s155
      %p157 = scmp.eq.s32.totalorder %s21, 0
      %p158 = por %p156, %p157
      %p159 = scmp.le.s32.totalorder 1, %s15
      %p160 = scmp.lt.s32.totalorder %s15, 3
      %p161 = pnand %p159, %p160
      %p162 = pneg %p161
      // Predicated region
      $region9: #{dnn_forward.1} parent=5 // pred_check
        _
      $region10: #{dnn_forward.1} parent=5 // pred_check_branch
        %164 = sbr.rel (%p161) target = $region12
      $region11: #{dnn_forward.1} parent=5 // pred_region
        %s165 = ssub.s32 %s15, 1
        // Predicated region
        $region13: #{dnn_forward.1} parent=11 // pred_check
          %p166 = pneg %p62
        $region14: #{dnn_forward.1} parent=11 // pred_check_branch
          %168 = sbr.rel (%p166) target = $region16
        $region15: #{dnn_forward.1} parent=11 // pred_region
          %s170 = ssub.s32 2048, 2048
          %171 = vsyncadd [#allocation5], %s170
          %s172 = sshll.u32 [#allocation4], 4
          %s173 = int_to_ptr.vmem [resolvable:$true] %s172
          %178 = dma.hbm_to_vmem [thread:$0]  %s1, 2048, %s173, [#allocation5], 64, 64, 4
        $region16: #{dnn_forward.1} parent=11 // pred_fallthru
          _
        // Predicated region
        $region17: #{dnn_forward.1} parent=11 // pred_check
          %p179 = pneg %p83
        $region18: #{dnn_forward.1} parent=11 // pred_check_branch
          %181 = sbr.rel (%p179) target = $region20
        $region19: #{dnn_forward.1} parent=11 // pred_region
          _
        $region20: #{dnn_forward.1} parent=11 // pred_fallthru
          _
        // Predicated region
        $region21: #{dnn_forward.1} parent=11 // pred_check
          %p182 = pneg %p104
        $region22: #{dnn_forward.1} parent=11 // pred_check_branch
          %184 = sbr.rel (%p182) target = $region24
        $region23: #{dnn_forward.1} parent=11 // pred_region
          %s186 = ssub.s32 1024, 1024
          %187 = vsyncadd [#allocation5], %s186
          %s188 = sshll.u32 [#allocation6], 4
          %s189 = int_to_ptr.vmem [resolvable:$true] %s188
          %194 = dma.hbm_to_vmem [thread:$0]  %s3, 1024, %s189, [#allocation5], 64, 64, 4
        $region24: #{dnn_forward.1} parent=11 // pred_fallthru
          _
        // Predicated region
        $region25: #{dnn_forward.1} parent=11 // pred_check
          %p195 = pneg %p125
        $region26: #{dnn_forward.1} parent=11 // pred_check_branch
          %197 = sbr.rel (%p195) target = $region28
        $region27: #{dnn_forward.1} parent=11 // pred_region
          _
        $region28: #{dnn_forward.1} parent=11 // pred_fallthru
          _
      $region12: #{dnn_forward.1} parent=5 // pred_fallthru
        _
      %p198 = scmp.lt.s32.totalorder %s15, 2
      // Predicated region
      $region29: #{dnn_forward.1} parent=5 // pred_check
        %p199 = pneg %p198
      $region30: #{dnn_forward.1} parent=5 // pred_check_branch
        %201 = sbr.rel (%p199) target = $region32
      $region31: #{dnn_forward.1} parent=5 // pred_region
        // Predicated region
        $region33: #{dnn_forward.1} parent=31 // pred_check
          %p202 = pneg %p35
        $region34: #{dnn_forward.1} parent=31 // pred_check_branch
          %204 = sbr.rel (%p202) target = $region36
        $region35: #{dnn_forward.1} parent=31 // pred_region
          %s205 = sand.u32 %s25, 1
          %s206 = scalar_lea.sflag [#allocation3], %s205
          %s207 = sand.u32 %s25, 1
          %s208 = smul.addr %s207, 64
          %s209 = scalar_lea.vmem [#allocation2], %s208
          %s210 = smul.u32 4, %s15
          %s212 = ssub.s32 1024, 1024
          %213 = vsyncadd %s206, %s212
          %s214 = smul.addr %s210, 2
          %s215 = smul.addr %s214, 128
          %s216 = scalar_lea.hbm %s0, %s215
          %s217 = sshll.u32 %s209, 4
          %s218 = int_to_ptr.vmem [resolvable:$true] %s217
          %223 = dma.hbm_to_vmem [thread:$0]  %s216, 1024, %s218, %s206, 256, 256, 16
        $region36: #{dnn_forward.1} parent=31 // pred_fallthru
          _
      $region32: #{dnn_forward.1} parent=5 // pred_fallthru
        _
      %p224 = scmp.le.s32.totalorder 1, %s15
      %p225 = scmp.lt.s32.totalorder %s15, 3
      %p226 = pnand %p224, %p225
      %p227 = pneg %p226
      // Predicated region
      $region37: #{dnn_forward.1} parent=5 // pred_check
        _
      $region38: #{dnn_forward.1} parent=5 // pred_check_branch
        %229 = sbr.rel (%p226) target = $region40
      $region39: #{dnn_forward.1} parent=5 // pred_region
        %s230 = ssub.s32 %s15, 1
        %s231 = sand.u32 %s28, 1
        %s232 = scalar_lea.sflag [#allocation3], %s231
        %s233 = sand.u32 %s28, 1
        %s234 = smul.addr %s233, 64
        %s235 = scalar_lea.vmem [#allocation2], %s234
        // Predicated region
        $region41: #{dnn_forward.1} parent=39 // pred_check
          %p236 = pneg %p41
        $region42: #{dnn_forward.1} parent=39 // pred_check_branch
          %238 = sbr.rel (%p236) target = $region44
        $region43: #{dnn_forward.1} parent=39 // pred_region
          %239 = dma.done %s232, 1024
        $region44: #{dnn_forward.1} parent=39 // pred_fallthru
          _
        // Predicated region
        $region45: #{dnn_forward.1} parent=39 // pred_check
          %p240 = pneg %p62
        $region46: #{dnn_forward.1} parent=39 // pred_check_branch
          %242 = sbr.rel (%p240) target = $region48
        $region47: #{dnn_forward.1} parent=39 // pred_region
          %243 = dma.done [#allocation5], 2048
        $region48: #{dnn_forward.1} parent=39 // pred_fallthru
          _
        // Predicated region
        $region49: #{dnn_forward.1} parent=39 // pred_check
          %p244 = pneg %p104
        $region50: #{dnn_forward.1} parent=39 // pred_check_branch
          %246 = sbr.rel (%p244) target = $region52
        $region51: #{dnn_forward.1} parent=39 // pred_region
          %247 = dma.done [#allocation5], 1024
        $region52: #{dnn_forward.1} parent=39 // pred_fallthru
          _
        %s248 = sand.u32 %s28, 1
        %s249 = scalar_lea.sflag [#allocation3], %s248
        %s250 = sand.u32 %s28, 1
        %s251 = smul.addr %s250, 64
        %s252 = scalar_lea.vmem [#allocation2], %s251
        %p253 = pneg %p41
        %p254 = pneg %p38
        %p255 = pneg %p62
        %p256 = pneg %p59
        %p257 = pneg %p83
        %p258 = pneg %p80
        %p259 = pneg %p104
        %p260 = pneg %p101
        %p261 = pneg %p125
        %p262 = pneg %p122
        %p263 = pneg %p151
        %p264 = pneg %p148
        %s265 = smul.u32 4, %s20
        %p266 = scmp.lt.s32.totalorder %s265, 7
        %s267 = scalar_select %p266, %s265, 7
        %s268 = smul.addr %s267, 4
        %s269 = scalar_lea.vmem %s5, %s268
        %s270 = smul.u32 4, %s20
        %s271 = smul.u32 4, %s20
        %p272 = scmp.lt.s32.totalorder %s271, 7
        %s273 = scalar_select %p272, %s271, 7
        %s274 = smul.addr %s273, 4
        %s275 = scalar_lea.vmem %s5, %s274
        %s276 = smul.u32 4, %s20
        %v278 = vld [vmem:[%s235] sm:$0xff]
        %v279 = vld [vmem:[%s235 + $0x8] sm:$0xff]
        %v280 = vld [vmem:[%s235 + $0x10] sm:$0xff]
        %v281 = vld [vmem:[%s235 + $0x18] sm:$0xff]
        %v282 = vld [vmem:[%s235 + $0x20] sm:$0xff]
        %v283 = vld [vmem:[%s235 + $0x28] sm:$0xff]
        %v284 = vld [vmem:[%s235 + $0x30] sm:$0xff]
        %v285 = vld [vmem:[%s235 + $0x38] sm:$0xff]
        %v286 = vpack.c.bf16 %v280, %v278
        %v287 = vpack.c.bf16 %v281, %v279
        %v288 = vpack.c.bf16 %v284, %v282
        %v289 = vpack.c.bf16 %v285, %v283
        %v290 = vld [vmem:[#allocation4] sm:$0xf]
        %v291 = vld [vmem:[#allocation4 + $0x4] sm:$0xf]
        %v292 = vld [vmem:[#allocation4 + $0x8] sm:$0xf]
        %v293 = vld [vmem:[#allocation4 + $0xc] sm:$0xf]
        %v294 = vld [vmem:[#allocation4 + $0x10] sm:$0xf]
        %v295 = vld [vmem:[#allocation4 + $0x14] sm:$0xf]
        %v296 = vld [vmem:[#allocation4 + $0x18] sm:$0xf]
        %v297 = vld [vmem:[#allocation4 + $0x1c] sm:$0xf]
        %v298 = vld [vmem:[#allocation4 + $0x20] sm:$0xf]
        %v299 = vld [vmem:[#allocation4 + $0x24] sm:$0xf]
        %v300 = vld [vmem:[#allocation4 + $0x28] sm:$0xf]
        %v301 = vld [vmem:[#allocation4 + $0x2c] sm:$0xf]
        %v302 = vld [vmem:[#allocation4 + $0x30] sm:$0xf]
        %v303 = vld [vmem:[#allocation4 + $0x34] sm:$0xf]
        %v304 = vld [vmem:[#allocation4 + $0x38] sm:$0xf]
        %v305 = vld [vmem:[#allocation4 + $0x3c] sm:$0xf]
        %v306 = vld [vmem:[#allocation4 + $0x40] sm:$0xf]
        %v307 = vld [vmem:[#allocation4 + $0x44] sm:$0xf]
        %v308 = vld [vmem:[#allocation4 + $0x48] sm:$0xf]
        %v309 = vld [vmem:[#allocation4 + $0x4c] sm:$0xf]
        %v310 = vld [vmem:[#allocation4 + $0x50] sm:$0xf]
        %v311 = vld [vmem:[#allocation4 + $0x54] sm:$0xf]
        %v312 = vld [vmem:[#allocation4 + $0x58] sm:$0xf]
        %v313 = vld [vmem:[#allocation4 + $0x5c] sm:$0xf]
        %v314 = vld [vmem:[#allocation4 + $0x60] sm:$0xf]
        %v315 = vld [vmem:[#allocation4 + $0x64] sm:$0xf]
        %v316 = vld [vmem:[#allocation4 + $0x68] sm:$0xf]
        %v317 = vld [vmem:[#allocation4 + $0x6c] sm:$0xf]
        %v318 = vld [vmem:[#allocation4 + $0x70] sm:$0xf]
        %v319 = vld [vmem:[#allocation4 + $0x74] sm:$0xf]
        %v320 = vld [vmem:[#allocation4 + $0x78] sm:$0xf]
        %v321 = vld [vmem:[#allocation4 + $0x7c] sm:$0xf]
        %v322 = vld [vmem:[%s2] sm:$0x1]
        %v324 = vlaneseq
        %v325 = vshrl.u32 %v324, 7
        %v326 = vsub.s32 0, %v325
        %v327 = vrot.slane %v322, %v326
        %v361 = vunpack.c.l.b16 %v290
        %v362 = vunpack.c.l.b16 %v291
        %v363 = vunpack.c.l.b16 %v292
        %v364 = vunpack.c.l.b16 %v293
        %v365 = vunpack.c.l.b16 %v294
        %v366 = vunpack.c.l.b16 %v295
        %v367 = vunpack.c.l.b16 %v296
        %v368 = vunpack.c.l.b16 %v297
        %v369 = vunpack.c.l.b16 %v298
        %v370 = vunpack.c.l.b16 %v299
        %v371 = vunpack.c.l.b16 %v300
        %v372 = vunpack.c.l.b16 %v301
        %v373 = vunpack.c.l.b16 %v302
        %v374 = vunpack.c.l.b16 %v303
        %v375 = vunpack.c.l.b16 %v304
        %v376 = vunpack.c.l.b16 %v305
        %v377 = vunpack.c.l.b16 %v306
        %v378 = vunpack.c.l.b16 %v307
        %v379 = vunpack.c.l.b16 %v308
        %v380 = vunpack.c.l.b16 %v309
        %v381 = vunpack.c.l.b16 %v310
        %v382 = vunpack.c.l.b16 %v311
        %v383 = vunpack.c.l.b16 %v312
        %v384 = vunpack.c.l.b16 %v313
        %v385 = vunpack.c.l.b16 %v314
        %v386 = vunpack.c.l.b16 %v315
        %v387 = vunpack.c.l.b16 %v316
        %v388 = vunpack.c.l.b16 %v317
        %v389 = vunpack.c.l.b16 %v318
        %v390 = vunpack.c.l.b16 %v319
        %v391 = vunpack.c.l.b16 %v320
        %v392 = vunpack.c.l.b16 %v321
        %v393 = vpack.c.b16 %v362, %v361
        %v394 = vpack.c.b16 %v364, %v363
        %v395 = vpack.c.b16 %v366, %v365
        %v396 = vpack.c.b16 %v368, %v367
        %v397 = vpack.c.b16 %v370, %v369
        %v398 = vpack.c.b16 %v372, %v371
        %v399 = vpack.c.b16 %v374, %v373
        %v400 = vpack.c.b16 %v376, %v375
        %v401 = vpack.c.b16 %v378, %v377
        %v402 = vpack.c.b16 %v380, %v379
        %v403 = vpack.c.b16 %v382, %v381
        %v404 = vpack.c.b16 %v384, %v383
        %v405 = vpack.c.b16 %v386, %v385
        %v406 = vpack.c.b16 %v388, %v387
        %v407 = vpack.c.b16 %v390, %v389
        %v408 = vpack.c.b16 %v392, %v391
        %425 = vmatprep.subr.bf16.mxu0 0
        %426 = vmatpush1.bf16.msra.mxu0 %v393
        %427 = vmatprep.subr.bf16.mxu0 0
        %428 = vmatpush1.bf16.msra.mxu0 %v394
        %429 = vmatprep.subr.bf16.mxu0 0
        %430 = vmatpush1.bf16.msra.mxu0 %v395
        %431 = vmatprep.subr.bf16.mxu0 0
        %432 = vmatpush1.bf16.msra.mxu0 %v396
        %433 = vmatprep.subr.bf16.mxu0 0
        %434 = vmatpush1.bf16.msra.mxu0 %v397
        %435 = vmatprep.subr.bf16.mxu0 0
        %436 = vmatpush1.bf16.msra.mxu0 %v398
        %437 = vmatprep.subr.bf16.mxu0 0
        %438 = vmatpush1.bf16.msra.mxu0 %v399
        %439 = vmatprep.subr.bf16.mxu0 0
        %440 = vmatpush1.bf16.msra.mxu0 %v400
        %441 = vmatprep.subr.bf16.mxu0 0
        %442 = vmatpush1.bf16.msra.mxu0 %v401
        %443 = vmatprep.subr.bf16.mxu0 0
        %444 = vmatpush1.bf16.msra.mxu0 %v402
        %445 = vmatprep.subr.bf16.mxu0 0
        %446 = vmatpush1.bf16.msra.mxu0 %v403
        %447 = vmatprep.subr.bf16.mxu0 0
        %448 = vmatpush1.bf16.msra.mxu0 %v404
        %449 = vmatprep.subr.bf16.mxu0 0
        %450 = vmatpush1.bf16.msra.mxu0 %v405
        %451 = vmatprep.subr.bf16.mxu0 0
        %452 = vmatpush1.bf16.msra.mxu0 %v406
        %453 = vmatprep.subr.bf16.mxu0 0
        %454 = vmatpush1.bf16.msra.mxu0 %v407
        %455 = vmatprep.subr.bf16.mxu0 0
        %456 = vmatpush1.bf16.msra.mxu0 %v408
        %457 = vmatprep.mubr.bf16.mxu0 %v287
        %458 = vmatmul.mubr.bf16.gmra.mrb[0].mxu0 %v286
        %v459 = vpop.f32.mrb[0].mxu0
        %v460 = vadd.f32 %v327, %v459
        %v461 = vpop.f32.mrb[0].mxu0
        %v462 = vpop.f32.mrb[0].mxu0
        %v463 = vadd.f32 %v327, %v462
        %v464 = vpop.f32.mrb[0].mxu0
        %465 = vmatprep.mubr.bf16.mxu0 %v289
        %466 = vmatmul.mubr.bf16.gmra.mrb[0].mxu0 %v288
        %v467 = vpop.f32.mrb[0].mxu0
        %v468 = vadd.f32 %v327, %v467
        %v469 = vpop.f32.mrb[0].mxu0
        %v470 = vpop.f32.mrb[0].mxu0
        %v471 = vadd.f32 %v327, %v470
        %v472 = vpop.f32.mrb[0].mxu0
        %473 = vdwg.mxu0
        %v474 = vmax.f32 %v460, 0.0
        %v475 = vmax.f32 %v463, 0.0
        %v476 = vmax.f32 %v468, 0.0
        %v477 = vmax.f32 %v471, 0.0
        %v478 = vpack.c.bf16 %v475, %v474
        %v479 = vpack.c.bf16 %v477, %v476
        %v480 = vld [vmem:[#allocation6] sm:$0xf]
        %v481 = vld [vmem:[#allocation6 + $0x4] sm:$0xf]
        %v482 = vld [vmem:[#allocation6 + $0x8] sm:$0xf]
        %v483 = vld [vmem:[#allocation6 + $0xc] sm:$0xf]
        %v484 = vld [vmem:[#allocation6 + $0x10] sm:$0xf]
        %v485 = vld [vmem:[#allocation6 + $0x14] sm:$0xf]
        %v486 = vld [vmem:[#allocation6 + $0x18] sm:$0xf]
        %v487 = vld [vmem:[#allocation6 + $0x1c] sm:$0xf]
        %v488 = vld [vmem:[#allocation6 + $0x20] sm:$0xf]
        %v489 = vld [vmem:[#allocation6 + $0x24] sm:$0xf]
        %v490 = vld [vmem:[#allocation6 + $0x28] sm:$0xf]
        %v491 = vld [vmem:[#allocation6 + $0x2c] sm:$0xf]
        %v492 = vld [vmem:[#allocation6 + $0x30] sm:$0xf]
        %v493 = vld [vmem:[#allocation6 + $0x34] sm:$0xf]
        %v494 = vld [vmem:[#allocation6 + $0x38] sm:$0xf]
        %v495 = vld [vmem:[#allocation6 + $0x3c] sm:$0xf]
        %v496 = vld [vmem:[%s4] sm:$0x1]
        %v498 = vlaneseq
        %v499 = vshrl.u32 %v498, 7
        %v500 = vsub.s32 0, %v499
        %v501 = vrot.slane %v496, %v500
        %v519 = vunpack.c.l.b16 %v480
        %v520 = vunpack.c.l.b16 %v481
        %v521 = vunpack.c.l.b16 %v482
        %v522 = vunpack.c.l.b16 %v483
        %v523 = vunpack.c.l.b16 %v484
        %v524 = vunpack.c.l.b16 %v485
        %v525 = vunpack.c.l.b16 %v486
        %v526 = vunpack.c.l.b16 %v487
        %v527 = vunpack.c.l.b16 %v488
        %v528 = vunpack.c.l.b16 %v489
        %v529 = vunpack.c.l.b16 %v490
        %v530 = vunpack.c.l.b16 %v491
        %v531 = vunpack.c.l.b16 %v492
        %v532 = vunpack.c.l.b16 %v493
        %v533 = vunpack.c.l.b16 %v494
        %v534 = vunpack.c.l.b16 %v495
        %v535 = vpack.c.b16 %v520, %v519
        %v536 = vpack.c.b16 %v522, %v521
        %v537 = vpack.c.b16 %v524, %v523
        %v538 = vpack.c.b16 %v526, %v525
        %v539 = vpack.c.b16 %v528, %v527
        %v540 = vpack.c.b16 %v530, %v529
        %v541 = vpack.c.b16 %v532, %v531
        %v542 = vpack.c.b16 %v534, %v533
        %551 = vmatprep.subr.bf16.mxu0 0
        %552 = vmatpush1.bf16.msra.mxu0 %v535
        %553 = vmatprep.subr.bf16.mxu0 0
        %554 = vmatpush1.bf16.msra.mxu0 %v536
        %555 = vmatprep.subr.bf16.mxu0 0
        %556 = vmatpush1.bf16.msra.mxu0 %v537
        %557 = vmatprep.subr.bf16.mxu0 0
        %558 = vmatpush1.bf16.msra.mxu0 %v538
        %559 = vmatprep.subr.bf16.mxu0 0
        %560 = vmatpush1.bf16.msra.mxu0 %v539
        %561 = vmatprep.subr.bf16.mxu0 0
        %562 = vmatpush1.bf16.msra.mxu0 %v540
        %563 = vmatprep.subr.bf16.mxu0 0
        %564 = vmatpush1.bf16.msra.mxu0 %v541
        %565 = vmatprep.subr.bf16.mxu0 0
        %566 = vmatpush1.bf16.msra.mxu0 %v542
        %567 = vmatprep.subr.bf16.mxu0 0
        %568 = vmatpush1.bf16.msra.mxu0 0
        %569 = vmatprep.subr.bf16.mxu0 0
        %570 = vmatpush1.bf16.msra.mxu0 0
        %571 = vmatprep.subr.bf16.mxu0 0
        %572 = vmatpush1.bf16.msra.mxu0 0
        %573 = vmatprep.subr.bf16.mxu0 0
        %574 = vmatpush1.bf16.msra.mxu0 0
        %575 = vmatprep.subr.bf16.mxu0 0
        %576 = vmatpush1.bf16.msra.mxu0 0
        %577 = vmatprep.subr.bf16.mxu0 0
        %578 = vmatpush1.bf16.msra.mxu0 0
        %579 = vmatprep.subr.bf16.mxu0 0
        %580 = vmatpush1.bf16.msra.mxu0 0
        %581 = vmatprep.subr.bf16.mxu0 0
        %582 = vmatpush1.bf16.msra.mxu0 0
        %583 = vmatprep.mubr.bf16.mxu0 0
        %584 = vmatmul.mubr.bf16.gmra.mrb[0].mxu0 %v478
        %v585 = vpop.f32.mrb[0].mxu0
        %v586 = vadd.f32 %v501, %v585
        %v587 = vpop.f32.mrb[0].mxu0
        %v588 = vpop.f32.mrb[0].mxu0
        %v589 = vadd.f32 %v501, %v588
        %v590 = vpop.f32.mrb[0].mxu0
        %591 = vmatprep.mubr.bf16.mxu0 0
        %592 = vmatmul.mubr.bf16.gmra.mrb[0].mxu0 %v479
        %v593 = vpop.f32.mrb[0].mxu0
        %v594 = vadd.f32 %v501, %v593
        %v595 = vpop.f32.mrb[0].mxu0
        %v596 = vpop.f32.mrb[0].mxu0
        %v597 = vadd.f32 %v501, %v596
        %v598 = vpop.f32.mrb[0].mxu0
        %599 = vdwg.mxu0
        %v600 = vpack.c.bf16 %v589, %v586
        %v601 = vpack.c.bf16 %v597, %v594
        %v604 = vunpack.c.l.b16 %v600
        %v605 = vunpack.c.h.b16 %v600
        %v606 = vunpack.c.l.b16 %v601
        %v607 = vunpack.c.h.b16 %v601
        %v608 = vpack.c.b16 %v604, %v604
        %v609 = vpack.c.b16 %v605, %v605
        %v610 = vpack.c.b16 %v606, %v606
        %v611 = vpack.c.b16 %v607, %v607
        %616 = vst [vmem:[%s275] sm:$0xf] %v608
        %617 = vst [vmem:[%s275 + $0x4] sm:$0xf] %v609
        %618 = vst [vmem:[%s275 + $0x8] sm:$0xf] %v610
        %619 = vst [vmem:[%s275 + $0xc] sm:$0xf] %v611
        %s620 = smul.u32 4, %s20
        %p621 = scmp.lt.s32.totalorder %s620, 7
        %s622 = scalar_select %p621, %s620, 7
        %s623 = smul.addr %s622, 4
        %s624 = scalar_lea.vmem %s5, %s623
        // Predicated region
        $region53: #{dnn_forward.1} parent=39 // pred_check
          %p625 = pneg %p148
        $region54: #{dnn_forward.1} parent=39 // pred_check_branch
          %627 = sbr.rel (%p625) target = $region56
        $region55: #{dnn_forward.1} parent=39 // pred_region
          %s628 = smul.u32 4, %s20
        $region56: #{dnn_forward.1} parent=39 // pred_fallthru
          _
      $region40: #{dnn_forward.1} parent=5 // pred_fallthru
        _
      %p629 = scmp.le.s32.totalorder 2, %s15
      // Predicated region
      $region57: #{dnn_forward.1} parent=5 // pred_check
        %p630 = pneg %p629
      $region58: #{dnn_forward.1} parent=5 // pred_check_branch
        %632 = sbr.rel (%p630) target = $region60
      $region59: #{dnn_forward.1} parent=5 // pred_region
        %s633 = ssub.s32 %s15, 2
        // Predicated region
        $region61: #{dnn_forward.1} parent=59 // pred_check
          %p634 = pneg %p154
        $region62: #{dnn_forward.1} parent=59 // pred_check_branch
          %636 = sbr.rel (%p634) target = $region64
        $region63: #{dnn_forward.1} parent=59 // pred_region
          %s637 = smul.u32 4, %s21
          %p638 = scmp.lt.s32.totalorder %s637, 7
          %s639 = scalar_select %p638, %s637, 7
          %s640 = smul.addr %s639, 4
          %s641 = scalar_lea.vmem %s5, %s640
        $region64: #{dnn_forward.1} parent=59 // pred_fallthru
          _
      $region60: #{dnn_forward.1} parent=5 // pred_fallthru
        _
    $region6: #{dnn_forward.1} parent=1 // loop_footer
      %s19 = sadd.s32 1, %s15
    $region7: #{dnn_forward.1} parent=1 // loop_footer_branch
      %14 = sbr.rel target = $region3
    $region8: #{dnn_forward.1} parent=1 // loop_exit
      _
    %642 = vsyncpa [#allocation3], 1
    %s643 = scalar_lea.sflag [#allocation3], 1
    %644 = vsyncpa %s643, 1
    %645 = vsyncpa [#allocation5], 1

</llo_original>
